<compile_context>
chip_gen: v5e
topology: v5e:2x2
jax: 0.10.0
libtpu: 0.0.40
codegen_flags: <defaults>
</compile_context>

<pallas_src>
import jax
import jax.numpy as jnp
import numpy as np
from jax.experimental import pallas as pl
from jax.experimental.pallas import tpu as pltpu


def _mxu_dtype():
    # bf16 matmul operands only on TPU; the CPU (interpret-mode) dot executor
    # does not support BF16 x BF16 = F32, so fall back to f32 there.
    return jnp.bfloat16 if jax.default_backend() == "tpu" else jnp.float32


def lstm_recurrence_kernel(xg_ref, whh_ref, h_out_ref, h_scratch, c_scratch):
    """One (batch-tile, time-chunk) grid step of the serial LSTM recurrence.

    Grid = (B // TB, S // S_chunk); time is the innermost ("arbitrary") axis,
    so the pipeline prefetches chunk t+1's xg while chunk t's recurrence runs.
    h/c are carried across time chunks in VMEM scratch.

    xg_ref    : (S_chunk, TB, 4H) f32   precomputed x_t @ W_ih^T + (b_ih+b_hh)
    whh_ref   : (H, 4H)                 recurrent weight, pre-transposed
    h_out_ref : (TB, H) f32             final hidden state h_{S-1}
    """
    t_chunk = pl.program_id(1)

    @pl.when(t_chunk == 0)
    def _():
        h_scratch[...] = jnp.zeros_like(h_scratch)
        c_scratch[...] = jnp.zeros_like(c_scratch)

    s_chunk, _, gdim = xg_ref.shape
    H = gdim // 4

    h = h_scratch[...]
    c = c_scratch[...]

    # Short, static chunk -> fully unrolled so the LLO scheduler can co-issue
    # the step-t MXU push, EUP tanh pushes and VPU c/h updates.
    # NOTE: whh_ref is read inside the loop (not hoisted) so Mosaic streams it
    # instead of pinning H*4H in vregs across the whole unrolled chunk.
    # TODO(synk): on v5e, drive the MXU weight-stationary across the chunk
    # (pltpu.matmul_push_rhs once, matmul_acc_lhs per step, matmul_pop) to
    # avoid re-pushing W_hh every timestep.
    for t in range(s_chunk):
        gates = xg_ref[t] + jnp.dot(h.astype(whh_ref.dtype), whh_ref[...],
                                    preferred_element_type=jnp.float32)
        # H % 128 == 0 => lane-aligned gate slices (PyTorch order i, f, g, o).
        # sigmoid(x) = 0.5*tanh(0.5*x) + 0.5: one EUP push + one VPU fma.
        i_g = 0.5 * jnp.tanh(0.5 * gates[:, 0 * H:1 * H]) + 0.5
        f_g = 0.5 * jnp.tanh(0.5 * gates[:, 1 * H:2 * H]) + 0.5
        g_g = jnp.tanh(gates[:, 2 * H:3 * H])
        o_g = 0.5 * jnp.tanh(0.5 * gates[:, 3 * H:4 * H]) + 0.5
        c = f_g * c + i_g * g_g
        h = o_g * jnp.tanh(c)

    h_scratch[...] = h
    c_scratch[...] = c
    # Output block index is constant along the time axis, so Pallas writes it
    # back to HBM only once per batch tile; this VMEM store is negligible.
    h_out_ref[...] = h


def lstm_forward(x, params, *, batch_tile=None, seq_chunk=None):
    """x: (B, S, I) float32. Returns (B, output_size) logits."""
    wih, whh, bias, wfc, bfc = params
    B, S, I = x.shape
    H = whh.shape[0]

    # --- Batch tile: multiple of 8 (f32 sublane tile).  For B >= 16 default
    # to B//2 so the "parallel" batch axis has >=2 grid steps and v7x's two
    # TensorCores each run a batch shard of the recurrence.
    if batch_tile is None:
        batch_tile = B // 2 if (B >= 16 and (B // 2) % 8 == 0) else B
    assert B % batch_tile == 0
    assert batch_tile % 8 == 0, "batch tile must be sublane (8) aligned"

    # --- Time chunk: bounds unroll length / live ranges and gives the
    # pipeline something to double-buffer along time.
    if seq_chunk is None:
        seq_chunk = next(s for s in range(min(S, 8), 0, -1) if S % s == 0)
    assert S % seq_chunk == 0

    # ---- Hoisted input projection: one (S*B, I) x (I, 4H) GEMM in XLA with
    # the (b_ih + b_hh) bias folded in; f32 accumulation.
    xg = jnp.einsum("bsi,ig->sbg", x.astype(wih.dtype), wih,
                    preferred_element_type=jnp.float32) + bias   # (S, B, 4H)
    # TODO(synk): for large S/H, keep the HBM leg of xg in bf16 (or fuse the
    # per-chunk x @ W_ih GEMM into the kernel via pltpu.emit_pipeline) to cut
    # this HBM round trip.

    # ---- VMEM budget: double-buffered xg chunk + W_hh + out + h/c scratch,
    # capped with headroom under v7x's 64 MiB physical VMEM.
    w_bytes = H * 4 * H * jnp.dtype(whh.dtype).itemsize
    xg_block_bytes = seq_chunk * batch_tile * 4 * H * 4
    out_bytes = batch_tile * H * 4
    scratch_bytes = 2 * batch_tile * H * 4
    vmem_limit = 2 * (xg_block_bytes + w_bytes + out_bytes) + scratch_bytes
    vmem_limit = int(min(max(vmem_limit + (1 << 20), 16 << 20), 48 << 20))

    h_last = pl.pallas_call(
        lstm_recurrence_kernel,
        out_shape=jax.ShapeDtypeStruct((B, H), jnp.float32),
        grid_spec=pltpu.PrefetchScalarGridSpec(
            num_scalar_prefetch=0,
            grid=(B // batch_tile, S // seq_chunk),   # batch outer, time inner
            in_specs=[
                pl.BlockSpec((seq_chunk, batch_tile, 4 * H),
                             lambda b, t: (t, b, 0)),             # xg chunk
                pl.BlockSpec((H, 4 * H), lambda b, t: (0, 0)),    # W_hh^T
            ],
            out_specs=pl.BlockSpec((batch_tile, H), lambda b, t: (b, 0)),
            scratch_shapes=[pltpu.VMEM((batch_tile, H), jnp.float32),   # h
                            pltpu.VMEM((batch_tile, H), jnp.float32)],  # c
        ),
        compiler_params=pltpu.CompilerParams(
            dimension_semantics=("parallel", "arbitrary"),
            vmem_limit_bytes=vmem_limit),
    )(xg, whh)

    # ---- Tiny classifier GEMM stays in XLA (O < 128 lanes). ----
    return jnp.dot(h_last, wfc, preferred_element_type=jnp.float32) + bfc


def lstm_reference(x, params):
    """Pure-JAX reference with the same operand dtypes / f32 accumulation."""
    wih, whh, bias, wfc, bfc = params
    B, S, I = x.shape
    H = whh.shape[0]
    h = jnp.zeros((B, H), jnp.float32)
    c = jnp.zeros((B, H), jnp.float32)
    xg = jnp.einsum("bsi,ig->sbg", x.astype(wih.dtype), wih,
                    preferred_element_type=jnp.float32) + bias
    for t in range(S):
        gates = xg[t] + jnp.dot(h.astype(whh.dtype), whh,
                                preferred_element_type=jnp.float32)
        i_g = jax.nn.sigmoid(gates[:, 0 * H:1 * H])
        f_g = jax.nn.sigmoid(gates[:, 1 * H:2 * H])
        g_g = jnp.tanh(gates[:, 2 * H:3 * H])
        o_g = jax.nn.sigmoid(gates[:, 3 * H:4 * H])
        c = f_g * c + i_g * g_g
        h = o_g * jnp.tanh(c)
    return jnp.dot(h, wfc, preferred_element_type=jnp.float32) + bfc


def init_params(key, input_size, hidden_size, output_size):
    """Deterministic synthetic parameters (PyTorch-style uniform init)."""
    ks = jax.random.split(key, 6)
    k = 1.0 / np.sqrt(hidden_size)
    u = lambda kk, shape: jax.random.uniform(kk, shape, jnp.float32, -k, k)
    w_ih = u(ks[0], (4 * hidden_size, input_size))     # PyTorch (4H, I)
    w_hh = u(ks[1], (4 * hidden_size, hidden_size))    # PyTorch (4H, H)
    b_ih = u(ks[2], (4 * hidden_size,))
    b_hh = u(ks[3], (4 * hidden_size,))
    w_fc = u(ks[4], (output_size, hidden_size))        # PyTorch (O, H)
    b_fc = u(ks[5], (output_size,))
    mdt = _mxu_dtype()  # bf16 MXU operands on TPU, f32 elsewhere
    # Pre-transpose for (activations @ weight).
    return (w_ih.T.astype(mdt),                         # (I, 4H)
            w_hh.T.astype(mdt),                         # (H, 4H)
            (b_ih + b_hh).reshape(1, 4 * hidden_size),  # (1, 4H)  f32
            w_fc.T,                                     # (H, O)   f32
            b_fc.reshape(1, output_size))               # (1, O)   f32


if __name__ == "__main__":
    batch, seq, input_size, hidden_size, output_size = 8, 8, 16, 128, 10

    key = jax.random.PRNGKey(0)
    kx, kp = jax.random.split(key)
    x = jax.random.normal(kx, (batch, seq, input_size), jnp.float32)
    params = init_params(kp, input_size, hidden_size, output_size)

    # seq_chunk=4 -> 2 time chunks, exercising the h/c VMEM carry path.
    out = jax.block_until_ready(lstm_forward(x, params, seq_chunk=4))
    ref = jax.block_until_ready(lstm_reference(x, params))

    assert out.shape == (batch, output_size)
    np.testing.assert_allclose(np.asarray(out), np.asarray(ref),
                               rtol=2e-3, atol=2e-3)
    print("KERNEL_OK")
</pallas_src>

<mosaic_0001>
module attributes {stable_mosaic.version = 11 : i64} {
  func.func @lstm_recurrence_kernel(%arg0: i32, %arg1: i32, %arg2: memref<4x8x512xf32, #tpu.memory_space<vmem>>, %arg3: memref<128x512xf32, #tpu.memory_space<vmem>>, %arg4: memref<8x128xf32, #tpu.memory_space<vmem>>, %arg5: memref<8x128xf32, #tpu.memory_space<vmem>>, %arg6: memref<8x128xf32, #tpu.memory_space<vmem>>) attributes {dimension_semantics = [#tpu.dimension_semantics<parallel>, #tpu.dimension_semantics<arbitrary>], iteration_bounds = array<i64: 1, 2>, scalar_prefetch = 0 : i64, scratch_operands = 2 : i64, tpu.core_type = #tpu.core_type<tc>, window_params = [{transform_indices = @transform_0, window_bounds = array<i64: 4, 8, 512>}, {pipeline_mode = #tpu.pipeline_mode<synchronous>, transform_indices = @transform_1, window_bounds = array<i64: 128, 512>}, {transform_indices = @transform_2, window_bounds = array<i64: 8, 128>}]} {
    %c0_i32 = arith.constant 0 : i32
    %0 = arith.cmpi eq, %arg1, %c0_i32 : i32
    %1 = arith.extui %0 : i1 to i32
    %c0_i32_0 = arith.constant 0 : i32
    %2 = arith.cmpi ne, %1, %c0_i32_0 : i32
    scf.if %2 {
      %cst_66 = arith.constant 0.000000e+00 : f32
      %152 = vector.broadcast %cst_66 : f32 to vector<8x128xf32>
      %c0_67 = arith.constant 0 : index
      %c0_68 = arith.constant 0 : index
      %153 = vector.load %arg5[%c0_67, %c0_68] : memref<8x128xf32, #tpu.memory_space<vmem>>, vector<8x128xf32>
      tpu.vector_store %arg5[%c0_67, %c0_68], %152 {strides = array<i32>} : memref<8x128xf32, #tpu.memory_space<vmem>>, vector<8x128xf32>,
      %cst_69 = arith.constant 0.000000e+00 : f32
      %154 = vector.broadcast %cst_69 : f32 to vector<8x128xf32>
      %c0_70 = arith.constant 0 : index
      %c0_71 = arith.constant 0 : index
      %155 = vector.load %arg6[%c0_70, %c0_71] : memref<8x128xf32, #tpu.memory_space<vmem>>, vector<8x128xf32>
      tpu.vector_store %arg6[%c0_70, %c0_71], %154 {strides = array<i32>} : memref<8x128xf32, #tpu.memory_space<vmem>>, vector<8x128xf32>,
    } else {
    }
    %c0 = arith.constant 0 : index
    %c0_1 = arith.constant 0 : index
    %3 = vector.load %arg5[%c0, %c0_1] : memref<8x128xf32, #tpu.memory_space<vmem>>, vector<8x128xf32>
    %c0_2 = arith.constant 0 : index
    %c0_3 = arith.constant 0 : index
    %4 = vector.load %arg6[%c0_2, %c0_3] : memref<8x128xf32, #tpu.memory_space<vmem>>, vector<8x128xf32>
    %c0_4 = arith.constant 0 : index
    %c0_5 = arith.constant 0 : index
    %c0_6 = arith.constant 0 : index
    %5 = vector.load %arg2[%c0_4, %c0_5, %c0_6] : memref<4x8x512xf32, #tpu.memory_space<vmem>>, vector<1x8x512xf32>
    %6 = vector.shape_cast %5 : vector<1x8x512xf32> to vector<8x512xf32>
    %c0_7 = arith.constant 0 : index
    %c0_8 = arith.constant 0 : index
    %7 = vector.load %arg3[%c0_7, %c0_8] : memref<128x512xf32, #tpu.memory_space<vmem>>, vector<128x512xf32>
    %cst = arith.constant dense<0.000000e+00> : vector<8x512xf32>
    %8 = tpu.matmul %3, %7, %cst {dimension_numbers = #tpu.dot_dimension_numbers<[1], [0], [0], [1], [0, 0, 1, 1], [], []>} : vector<8x128xf32>, vector<128x512xf32>, vector<8x512xf32> -> vector<8x512xf32>
    %9 = arith.addf %6, %8 : vector<8x512xf32>
    %10 = vector.extract_strided_slice %9 {offsets = [0, 0], sizes = [8, 128], strides = [1, 1]} : vector<8x512xf32> to vector<8x128xf32>
    %cst_9 = arith.constant 5.000000e-01 : f32
    %11 = vector.broadcast %cst_9 : f32 to vector<8x128xf32>
    %12 = arith.mulf %11, %10 : vector<8x128xf32>
    %13 = math.tanh %12 : vector<8x128xf32>
    %cst_10 = arith.constant 5.000000e-01 : f32
    %14 = vector.broadcast %cst_10 : f32 to vector<8x128xf32>
    %15 = arith.mulf %14, %13 : vector<8x128xf32>
    %cst_11 = arith.constant 5.000000e-01 : f32
    %16 = vector.broadcast %cst_11 : f32 to vector<8x128xf32>
    %17 = arith.addf %15, %16 : vector<8x128xf32>
    %18 = vector.extract_strided_slice %9 {offsets = [0, 128], sizes = [8, 128], strides = [1, 1]} : vector<8x512xf32> to vector<8x128xf32>
    %cst_12 = arith.constant 5.000000e-01 : f32
    %19 = vector.broadcast %cst_12 : f32 to vector<8x128xf32>
    %20 = arith.mulf %19, %18 : vector<8x128xf32>
    %21 = math.tanh %20 : vector<8x128xf32>
    %cst_13 = arith.constant 5.000000e-01 : f32
    %22 = vector.broadcast %cst_13 : f32 to vector<8x128xf32>
    %23 = arith.mulf %22, %21 : vector<8x128xf32>
    %cst_14 = arith.constant 5.000000e-01 : f32
    %24 = vector.broadcast %cst_14 : f32 to vector<8x128xf32>
    %25 = arith.addf %23, %24 : vector<8x128xf32>
    %26 = vector.extract_strided_slice %9 {offsets = [0, 256], sizes = [8, 128], strides = [1, 1]} : vector<8x512xf32> to vector<8x128xf32>
    %27 = math.tanh %26 : vector<8x128xf32>
    %28 = vector.extract_strided_slice %9 {offsets = [0, 384], sizes = [8, 128], strides = [1, 1]} : vector<8x512xf32> to vector<8x128xf32>
    %cst_15 = arith.constant 5.000000e-01 : f32
    %29 = vector.broadcast %cst_15 : f32 to vector<8x128xf32>
    %30 = arith.mulf %29, %28 : vector<8x128xf32>
    %31 = math.tanh %30 : vector<8x128xf32>
    %cst_16 = arith.constant 5.000000e-01 : f32
    %32 = vector.broadcast %cst_16 : f32 to vector<8x128xf32>
    %33 = arith.mulf %32, %31 : vector<8x128xf32>
    %cst_17 = arith.constant 5.000000e-01 : f32
    %34 = vector.broadcast %cst_17 : f32 to vector<8x128xf32>
    %35 = arith.addf %33, %34 : vector<8x128xf32>
    %36 = arith.mulf %25, %4 : vector<8x128xf32>
    %37 = arith.mulf %17, %27 : vector<8x128xf32>
    %38 = arith.addf %36, %37 : vector<8x128xf32>
    %39 = math.tanh %38 : vector<8x128xf32>
    %40 = arith.mulf %35, %39 : vector<8x128xf32>
    %c1 = arith.constant 1 : index
    %c0_18 = arith.constant 0 : index
    %c0_19 = arith.constant 0 : index
    %41 = vector.load %arg2[%c1, %c0_18, %c0_19] : memref<4x8x512xf32, #tpu.memory_space<vmem>>, vector<1x8x512xf32>
    %42 = vector.shape_cast %41 : vector<1x8x512xf32> to vector<8x512xf32>
    %c0_20 = arith.constant 0 : index
    %c0_21 = arith.constant 0 : index
    %43 = vector.load %arg3[%c0_20, %c0_21] : memref<128x512xf32, #tpu.memory_space<vmem>>, vector<128x512xf32>
    %cst_22 = arith.constant dense<0.000000e+00> : vector<8x512xf32>
    %44 = tpu.matmul %40, %43, %cst_22 {dimension_numbers = #tpu.dot_dimension_numbers<[1], [0], [0], [1], [0, 0, 1, 1], [], []>} : vector<8x128xf32>, vector<128x512xf32>, vector<8x512xf32> -> vector<8x512xf32>
    %45 = arith.addf %42, %44 : vector<8x512xf32>
    %46 = vector.extract_strided_slice %45 {offsets = [0, 0], sizes = [8, 128], strides = [1, 1]} : vector<8x512xf32> to vector<8x128xf32>
    %cst_23 = arith.constant 5.000000e-01 : f32
    %47 = vector.broadcast %cst_23 : f32 to vector<8x128xf32>
    %48 = arith.mulf %47, %46 : vector<8x128xf32>
    %49 = math.tanh %48 : vector<8x128xf32>
    %cst_24 = arith.constant 5.000000e-01 : f32
    %50 = vector.broadcast %cst_24 : f32 to vector<8x128xf32>
    %51 = arith.mulf %50, %49 : vector<8x128xf32>
    %cst_25 = arith.constant 5.000000e-01 : f32
    %52 = vector.broadcast %cst_25 : f32 to vector<8x128xf32>
    %53 = arith.addf %51, %52 : vector<8x128xf32>
    %54 = vector.extract_strided_slice %45 {offsets = [0, 128], sizes = [8, 128], strides = [1, 1]} : vector<8x512xf32> to vector<8x128xf32>
    %cst_26 = arith.constant 5.000000e-01 : f32
    %55 = vector.broadcast %cst_26 : f32 to vector<8x128xf32>
    %56 = arith.mulf %55, %54 : vector<8x128xf32>
    %57 = math.tanh %56 : vector<8x128xf32>
    %cst_27 = arith.constant 5.000000e-01 : f32
    %58 = vector.broadcast %cst_27 : f32 to vector<8x128xf32>
    %59 = arith.mulf %58, %57 : vector<8x128xf32>
    %cst_28 = arith.constant 5.000000e-01 : f32
    %60 = vector.broadcast %cst_28 : f32 to vector<8x128xf32>
    %61 = arith.addf %59, %60 : vector<8x128xf32>
    %62 = vector.extract_strided_slice %45 {offsets = [0, 256], sizes = [8, 128], strides = [1, 1]} : vector<8x512xf32> to vector<8x128xf32>
    %63 = math.tanh %62 : vector<8x128xf32>
    %64 = vector.extract_strided_slice %45 {offsets = [0, 384], sizes = [8, 128], strides = [1, 1]} : vector<8x512xf32> to vector<8x128xf32>
    %cst_29 = arith.constant 5.000000e-01 : f32
    %65 = vector.broadcast %cst_29 : f32 to vector<8x128xf32>
    %66 = arith.mulf %65, %64 : vector<8x128xf32>
    %67 = math.tanh %66 : vector<8x128xf32>
    %cst_30 = arith.constant 5.000000e-01 : f32
    %68 = vector.broadcast %cst_30 : f32 to vector<8x128xf32>
    %69 = arith.mulf %68, %67 : vector<8x128xf32>
    %cst_31 = arith.constant 5.000000e-01 : f32
    %70 = vector.broadcast %cst_31 : f32 to vector<8x128xf32>
    %71 = arith.addf %69, %70 : vector<8x128xf32>
    %72 = arith.mulf %61, %38 : vector<8x128xf32>
    %73 = arith.mulf %53, %63 : vector<8x128xf32>
    %74 = arith.addf %72, %73 : vector<8x128xf32>
    %75 = math.tanh %74 : vector<8x128xf32>
    %76 = arith.mulf %71, %75 : vector<8x128xf32>
    %c2 = arith.constant 2 : index
    %c0_32 = arith.constant 0 : index
    %c0_33 = arith.constant 0 : index
    %77 = vector.load %arg2[%c2, %c0_32, %c0_33] : memref<4x8x512xf32, #tpu.memory_space<vmem>>, vector<1x8x512xf32>
    %78 = vector.shape_cast %77 : vector<1x8x512xf32> to vector<8x512xf32>
    %c0_34 = arith.constant 0 : index
    %c0_35 = arith.constant 0 : index
    %79 = vector.load %arg3[%c0_34, %c0_35] : memref<128x512xf32, #tpu.memory_space<vmem>>, vector<128x512xf32>
    %cst_36 = arith.constant dense<0.000000e+00> : vector<8x512xf32>
    %80 = tpu.matmul %76, %79, %cst_36 {dimension_numbers = #tpu.dot_dimension_numbers<[1], [0], [0], [1], [0, 0, 1, 1], [], []>} : vector<8x128xf32>, vector<128x512xf32>, vector<8x512xf32> -> vector<8x512xf32>
    %81 = arith.addf %78, %80 : vector<8x512xf32>
    %82 = vector.extract_strided_slice %81 {offsets = [0, 0], sizes = [8, 128], strides = [1, 1]} : vector<8x512xf32> to vector<8x128xf32>
    %cst_37 = arith.constant 5.000000e-01 : f32
    %83 = vector.broadcast %cst_37 : f32 to vector<8x128xf32>
    %84 = arith.mulf %83, %82 : vector<8x128xf32>
    %85 = math.tanh %84 : vector<8x128xf32>
    %cst_38 = arith.constant 5.000000e-01 : f32
    %86 = vector.broadcast %cst_38 : f32 to vector<8x128xf32>
    %87 = arith.mulf %86, %85 : vector<8x128xf32>
    %cst_39 = arith.constant 5.000000e-01 : f32
    %88 = vector.broadcast %cst_39 : f32 to vector<8x128xf32>
    %89 = arith.addf %87, %88 : vector<8x128xf32>
    %90 = vector.extract_strided_slice %81 {offsets = [0, 128], sizes = [8, 128], strides = [1, 1]} : vector<8x512xf32> to vector<8x128xf32>
    %cst_40 = arith.constant 5.000000e-01 : f32
    %91 = vector.broadcast %cst_40 : f32 to vector<8x128xf32>
    %92 = arith.mulf %91, %90 : vector<8x128xf32>
    %93 = math.tanh %92 : vector<8x128xf32>
    %cst_41 = arith.constant 5.000000e-01 : f32
    %94 = vector.broadcast %cst_41 : f32 to vector<8x128xf32>
    %95 = arith.mulf %94, %93 : vector<8x128xf32>
    %cst_42 = arith.constant 5.000000e-01 : f32
    %96 = vector.broadcast %cst_42 : f32 to vector<8x128xf32>
    %97 = arith.addf %95, %96 : vector<8x128xf32>
    %98 = vector.extract_strided_slice %81 {offsets = [0, 256], sizes = [8, 128], strides = [1, 1]} : vector<8x512xf32> to vector<8x128xf32>
    %99 = math.tanh %98 : vector<8x128xf32>
    %100 = vector.extract_strided_slice %81 {offsets = [0, 384], sizes = [8, 128], strides = [1, 1]} : vector<8x512xf32> to vector<8x128xf32>
    %cst_43 = arith.constant 5.000000e-01 : f32
    %101 = vector.broadcast %cst_43 : f32 to vector<8x128xf32>
    %102 = arith.mulf %101, %100 : vector<8x128xf32>
    %103 = math.tanh %102 : vector<8x128xf32>
    %cst_44 = arith.constant 5.000000e-01 : f32
    %104 = vector.broadcast %cst_44 : f32 to vector<8x128xf32>
    %105 = arith.mulf %104, %103 : vector<8x128xf32>
    %cst_45 = arith.constant 5.000000e-01 : f32
    %106 = vector.broadcast %cst_45 : f32 to vector<8x128xf32>
    %107 = arith.addf %105, %106 : vector<8x128xf32>
    %108 = arith.mulf %97, %74 : vector<8x128xf32>
    %109 = arith.mulf %89, %99 : vector<8x128xf32>
    %110 = arith.addf %108, %109 : vector<8x128xf32>
    %111 = math.tanh %110 : vector<8x128xf32>
    %112 = arith.mulf %107, %111 : vector<8x128xf32>
    %c3 = arith.constant 3 : index
    %c0_46 = arith.constant 0 : index
    %c0_47 = arith.constant 0 : index
    %113 = vector.load %arg2[%c3, %c0_46, %c0_47] : memref<4x8x512xf32, #tpu.memory_space<vmem>>, vector<1x8x512xf32>
    %114 = vector.shape_cast %113 : vector<1x8x512xf32> to vector<8x512xf32>
    %c0_48 = arith.constant 0 : index
    %c0_49 = arith.constant 0 : index
    %115 = vector.load %arg3[%c0_48, %c0_49] : memref<128x512xf32, #tpu.memory_space<vmem>>, vector<128x512xf32>
    %cst_50 = arith.constant dense<0.000000e+00> : vector<8x512xf32>
    %116 = tpu.matmul %112, %115, %cst_50 {dimension_numbers = #tpu.dot_dimension_numbers<[1], [0], [0], [1], [0, 0, 1, 1], [], []>} : vector<8x128xf32>, vector<128x512xf32>, vector<8x512xf32> -> vector<8x512xf32>
    %117 = arith.addf %114, %116 : vector<8x512xf32>
    %118 = vector.extract_strided_slice %117 {offsets = [0, 0], sizes = [8, 128], strides = [1, 1]} : vector<8x512xf32> to vector<8x128xf32>
    %cst_51 = arith.constant 5.000000e-01 : f32
    %119 = vector.broadcast %cst_51 : f32 to vector<8x128xf32>
    %120 = arith.mulf %119, %118 : vector<8x128xf32>
    %121 = math.tanh %120 : vector<8x128xf32>
    %cst_52 = arith.constant 5.000000e-01 : f32
    %122 = vector.broadcast %cst_52 : f32 to vector<8x128xf32>
    %123 = arith.mulf %122, %121 : vector<8x128xf32>
    %cst_53 = arith.constant 5.000000e-01 : f32
    %124 = vector.broadcast %cst_53 : f32 to vector<8x128xf32>
    %125 = arith.addf %123, %124 : vector<8x128xf32>
    %126 = vector.extract_strided_slice %117 {offsets = [0, 128], sizes = [8, 128], strides = [1, 1]} : vector<8x512xf32> to vector<8x128xf32>
    %cst_54 = arith.constant 5.000000e-01 : f32
    %127 = vector.broadcast %cst_54 : f32 to vector<8x128xf32>
    %128 = arith.mulf %127, %126 : vector<8x128xf32>
    %129 = math.tanh %128 : vector<8x128xf32>
    %cst_55 = arith.constant 5.000000e-01 : f32
    %130 = vector.broadcast %cst_55 : f32 to vector<8x128xf32>
    %131 = arith.mulf %130, %129 : vector<8x128xf32>
    %cst_56 = arith.constant 5.000000e-01 : f32
    %132 = vector.broadcast %cst_56 : f32 to vector<8x128xf32>
    %133 = arith.addf %131, %132 : vector<8x128xf32>
    %134 = vector.extract_strided_slice %117 {offsets = [0, 256], sizes = [8, 128], strides = [1, 1]} : vector<8x512xf32> to vector<8x128xf32>
    %135 = math.tanh %134 : vector<8x128xf32>
    %136 = vector.extract_strided_slice %117 {offsets = [0, 384], sizes = [8, 128], strides = [1, 1]} : vector<8x512xf32> to vector<8x128xf32>
    %cst_57 = arith.constant 5.000000e-01 : f32
    %137 = vector.broadcast %cst_57 : f32 to vector<8x128xf32>
    %138 = arith.mulf %137, %136 : vector<8x128xf32>
    %139 = math.tanh %138 : vector<8x128xf32>
    %cst_58 = arith.constant 5.000000e-01 : f32
    %140 = vector.broadcast %cst_58 : f32 to vector<8x128xf32>
    %141 = arith.mulf %140, %139 : vector<8x128xf32>
    %cst_59 = arith.constant 5.000000e-01 : f32
    %142 = vector.broadcast %cst_59 : f32 to vector<8x128xf32>
    %143 = arith.addf %141, %142 : vector<8x128xf32>
    %144 = arith.mulf %133, %110 : vector<8x128xf32>
    %145 = arith.mulf %125, %135 : vector<8x128xf32>
    %146 = arith.addf %144, %145 : vector<8x128xf32>
    %147 = math.tanh %146 : vector<8x128xf32>
    %148 = arith.mulf %143, %147 : vector<8x128xf32>
    %c0_60 = arith.constant 0 : index
    %c0_61 = arith.constant 0 : index
    %149 = vector.load %arg5[%c0_60, %c0_61] : memref<8x128xf32, #tpu.memory_space<vmem>>, vector<8x128xf32>
    tpu.vector_store %arg5[%c0_60, %c0_61], %148 {strides = array<i32>} : memref<8x128xf32, #tpu.memory_space<vmem>>, vector<8x128xf32>,
    %c0_62 = arith.constant 0 : index
    %c0_63 = arith.constant 0 : index
    %150 = vector.load %arg6[%c0_62, %c0_63] : memref<8x128xf32, #tpu.memory_space<vmem>>, vector<8x128xf32>
    tpu.vector_store %arg6[%c0_62, %c0_63], %146 {strides = array<i32>} : memref<8x128xf32, #tpu.memory_space<vmem>>, vector<8x128xf32>,
    %c0_64 = arith.constant 0 : index
    %c0_65 = arith.constant 0 : index
    %151 = vector.load %arg4[%c0_64, %c0_65] : memref<8x128xf32, #tpu.memory_space<vmem>>, vector<8x128xf32>
    tpu.vector_store %arg4[%c0_64, %c0_65], %148 {strides = array<i32>} : memref<8x128xf32, #tpu.memory_space<vmem>>, vector<8x128xf32>,
    return
  }
  func.func @transform_0(%arg0: i32, %arg1: i32) -> (i32, i32, i32) {
    %c0_i32 = arith.constant 0 : i32
    %c0_i32_0 = arith.constant 0 : i32
    return %arg1, %arg0, %c0_i32 : i32, i32, i32
  }
  func.func @transform_1(%arg0: i32, %arg1: i32) -> (i32, i32) {
    %c0_i32 = arith.constant 0 : i32
    %c0_i32_0 = arith.constant 0 : i32
    %c0_i32_1 = arith.constant 0 : i32
    return %c0_i32, %c0_i32_0 : i32, i32
  }
  func.func @transform_2(%arg0: i32, %arg1: i32) -> (i32, i32) {
    %c0_i32 = arith.constant 0 : i32
    %c0_i32_0 = arith.constant 0 : i32
    return %arg0, %c0_i32 : i32, i32
  }
}

</mosaic_0001>

<llo_original>
// kernel: tpu_custom_call.1
$region0: #{tpu_custom_call.1}
  #allocation0 [shape = 'u32[]', space=smem, size = 0x4, offset = 0x4, fixed_abs, tag = 'smem constant byte address 0x4 - core index']
  #allocation1 [shape = 'u32[72,128]{1,0:T(1,128)}', space=vmem, size = 0x9000, scoped, tag = 'internal scratch']
  #allocation2 [shape = 'f32[8,128]{1,0:T(8,128)}', space=vmem, size = 0x1000, scoped, tag = 'scratch operand']
  #allocation3 [shape = 'f32[8,128]{1,0:T(8,128)}', space=vmem, size = 0x1000, scoped, tag = 'scratch operand']
  %s0 = inlined_call_operand.hbm [shape: f32[8,8,512], index: 0, kind: input, shape index: {}]
  %s1 = inlined_call_operand.hbm [shape: f32[128,512], index: 1, kind: input, shape index: {}]
  %s2 = inlined_call_operand.hbm [shape: f32[8,128], index: 2, kind: output, shape index: {}]
  %s3 = sld [smem:[#allocation0]]
  $region53: #{tpu_custom_call.1} parent=0
    _
  %s5 = ssub.s32 1, %s3
  %s6 = scalar_select 0, %s5, %s3
  $region1: #{tpu_custom_call.1} parent=0
    #allocation4 [shape = 'u8[131072]{0}', space=vmem, size = 0x20000, scoped, tag = 'input window, operand 0']
    #allocation5 [shape = 's32[2]{0}', space=sflag, size = 0x8, scoped, tag = 'scoped memory for tpu_custom_call.1']
    #allocation6 [shape = 's32[2]{0}', space=sflag, size = 0x8, scoped, tag = 'scoped memory for tpu_custom_call.1']
    #allocation7 [shape = 'u8[262144]{0}', space=vmem, size = 0x40000, scoped, tag = 'input window, operand 1, single buffered']
    #allocation8 [shape = 's32[1]{0}', space=sflag, size = 0x4, scoped, tag = 'scoped memory for tpu_custom_call.1']
    #allocation9 [shape = 'u8[4096]{0}', space=vmem, size = 0x1000, scoped, tag = 'output window, operand 0, single buffered']
    %7 = vsyncpa [#allocation5], 0
    %s8 = scalar_lea.sflag [#allocation5], 1
    %9 = vsyncpa %s8, 0
    %10 = vsyncpa [#allocation8], 0
    %11 = vsyncpa [#allocation6], 0
    loop: start=0, step=1, limit=4
    $region2: #{tpu_custom_call.1} parent=1 // loop_pre_header
      _
    $region3: #{tpu_custom_call.1} parent=1 // loop_header
      %s13 = sphi 0, %s17
      %p14 = scmp.ge.s32.totalorder %s13, 4
      %s20 = sphi 0, %s32
      %s21 = sphi 0, %s28
      %s22 = sphi 0, %s20
      %s23 = sphi 0, %s21
      %s24 = sphi 0, %s22
      %s25 = sphi 0, %s23
      %s37 = sphi 0, %s39
      %s40 = sphi 0, %s37
      %s41 = sphi 0, %s40
      %s57 = sphi 0, %s41
      %s61 = sphi 0, %s61
      %s63 = sphi 0, %s61
      %s64 = sphi 0, %s63
      %s78 = sphi 0, %s64
      %s84 = sphi 0, %s86
      %s87 = sphi 0, %s84
      %s88 = sphi 0, %s87
      %s104 = sphi 0, %s88
    $region4: #{tpu_custom_call.1} parent=1 // loop_header_branch
      %16 = sbr.rel (%p14) target = $region8
    $region5: #{tpu_custom_call.1} parent=1 // loop_body
      %s18 = ssub.s32 %s13, 1
      %s19 = ssub.s32 %s13, 2
      %s26 = sadd.s32 1, %s21
      %p27 = scmp.ge.s32.totalorder %s26, 2
      %s28 = scalar_select %p27, 0, %s26
      %s29 = sadd.s32 1, %s20
      %s30 = scalar_select %p27, %s29, %s20
      %p31 = scmp.ge.s32.totalorder %s30, 1
      %s32 = scalar_select %p31, 0, %s30
      %s33 = ssub.s32 %s21, %s28
      %s34 = ssub.s32 %s20, %s32
      %s35 = sor.u32 %s33, %s34
      %p36 = scmp.eq.s32.totalorder %s35, 0
      %s38 = sadd.s32 %s37, 1
      %s39 = scalar_select %p36, %s37, %s38
      %p42 = pneg %p36
      %p43 = scmp.eq.s32.totalorder %s13, 1
      %p44 = por %p42, %p43
      %p45 = scmp.ne.s32.totalorder %s37, %s40
      %p46 = scmp.eq.s32.totalorder %s13, 0
      %p47 = por %p45, %p46
      %p48 = scmp.ne.s32.totalorder %s37, %s40
      %p49 = scmp.eq.s32.totalorder %s18, 1
      %p50 = por %p48, %p49
      %p51 = scmp.ne.s32.totalorder %s40, %s41
      %p52 = scmp.eq.s32.totalorder %s18, 0
      %p53 = por %p51, %p52
      %p54 = scmp.ne.s32.totalorder %s40, %s41
      %p55 = scmp.eq.s32.totalorder %s19, 1
      %p56 = por %p54, %p55
      %p58 = scmp.ne.s32.totalorder %s41, %s57
      %p59 = scmp.eq.s32.totalorder %s19, 0
      %p60 = por %p58, %p59
      %s62 = sadd.s32 %s61, 1
      %p65 = scmp.eq.s32.totalorder %s13, 1
      %p66 = scmp.ne.s32.totalorder %s61, %s63
      %p67 = scmp.eq.s32.totalorder %s13, 0
      %p68 = por %p66, %p67
      %p69 = scmp.ne.s32.totalorder %s61, %s63
      %p70 = scmp.eq.s32.totalorder %s18, 1
      %p71 = por %p69, %p70
      %p72 = scmp.ne.s32.totalorder %s63, %s64
      %p73 = scmp.eq.s32.totalorder %s18, 0
      %p74 = por %p72, %p73
      %p75 = scmp.ne.s32.totalorder %s63, %s64
      %p76 = scmp.eq.s32.totalorder %s19, 1
      %p77 = por %p75, %p76
      %p79 = scmp.ne.s32.totalorder %s64, %s78
      %p80 = scmp.eq.s32.totalorder %s19, 0
      %p81 = por %p79, %p80
      %s82 = ssub.s32 %s20, %s32
      %p83 = scmp.eq.s32.totalorder %s82, 0
      %s85 = sadd.s32 %s84, 1
      %s86 = scalar_select %p83, %s84, %s85
      %p89 = pneg %p83
      %p90 = scmp.eq.s32.totalorder %s13, 1
      %p91 = por %p89, %p90
      %p92 = scmp.ne.s32.totalorder %s84, %s87
      %p93 = scmp.eq.s32.totalorder %s13, 0
      %p94 = por %p92, %p93
      %p95 = scmp.ne.s32.totalorder %s84, %s87
      %p96 = scmp.eq.s32.totalorder %s18, 1
      %p97 = por %p95, %p96
      %p98 = scmp.ne.s32.totalorder %s87, %s88
      %p99 = scmp.eq.s32.totalorder %s18, 0
      %p100 = por %p98, %p99
      %p101 = scmp.ne.s32.totalorder %s87, %s88
      %p102 = scmp.eq.s32.totalorder %s19, 1
      %p103 = por %p101, %p102
      %p105 = scmp.ne.s32.totalorder %s88, %s104
      %p106 = scmp.eq.s32.totalorder %s19, 0
      %p107 = por %p105, %p106
      %p108 = scmp.le.s32.totalorder 1, %s13
      %p109 = scmp.lt.s32.totalorder %s13, 3
      %p110 = pnand %p108, %p109
      %p111 = pneg %p110
      // Predicated region
      $region9: #{tpu_custom_call.1} parent=5 // pred_check
        _
      $region10: #{tpu_custom_call.1} parent=5 // pred_check_branch
        %113 = sbr.rel (%p110) target = $region12
      $region11: #{tpu_custom_call.1} parent=5 // pred_region
        %s114 = ssub.s32 %s13, 1
        // Predicated region
        $region13: #{tpu_custom_call.1} parent=11 // pred_check
          %p115 = pneg %p74
        $region14: #{tpu_custom_call.1} parent=11 // pred_check_branch
          %117 = sbr.rel (%p115) target = $region16
        $region15: #{tpu_custom_call.1} parent=11 // pred_region
          %119 = vsyncadd [#allocation8], 0
          %s120 = sshll.u32 %s1, 4
          %s121 = int_to_ptr.hbm [resolvable:$true] %s120
          %s122 = sshll.u32 [#allocation7], 4
          %s123 = int_to_ptr.vmem [resolvable:$true] %s122
          %128 = dma.hbm_to_vmem [thread:$0]  %s121, 8192, %s123, [#allocation8], 512, 512, 32
        $region16: #{tpu_custom_call.1} parent=11 // pred_fallthru
          _
      $region12: #{tpu_custom_call.1} parent=5 // pred_fallthru
        _
      %p129 = scmp.lt.s32.totalorder %s13, 2
      // Predicated region
      $region17: #{tpu_custom_call.1} parent=5 // pred_check
        %p130 = pneg %p129
      $region18: #{tpu_custom_call.1} parent=5 // pred_check_branch
        %132 = sbr.rel (%p130) target = $region20
      $region19: #{tpu_custom_call.1} parent=5 // pred_region
        // Predicated region
        $region21: #{tpu_custom_call.1} parent=19 // pred_check
          %p133 = pneg %p47
        $region22: #{tpu_custom_call.1} parent=19 // pred_check_branch
          %135 = sbr.rel (%p133) target = $region24
        $region23: #{tpu_custom_call.1} parent=19 // pred_region
          %s136 = sand.u32 %s37, 1
          %s137 = scalar_lea.sflag [#allocation5], %s136
          %s138 = sand.u32 %s37, 1
          %s139 = smul.addr %s138, 128
          %s140 = scalar_lea.vmem [#allocation4], %s139
          %s141 = smul.u32 4, %s21
          %143 = vsyncadd %s137, 0
          %s144 = smul.addr %s20, 4
          %s145 = smul.addr %s141, 4
          %s146 = sadd.s32 %s144, %s145
          %s147 = smul.addr %s146, 8
          %s148 = scalar_lea.hbm %s0, %s147
          %s149 = sshll.u32 %s148, 4
          %s150 = int_to_ptr.hbm [resolvable:$true] %s149
          %s151 = sshll.u32 %s140, 4
          %s152 = int_to_ptr.vmem [resolvable:$true] %s151
          %157 = dma.hbm_to_vmem [thread:$0]  %s150, 2048, %s152, %s137, 512, 512, 32
        $region24: #{tpu_custom_call.1} parent=19 // pred_fallthru
          _
      $region20: #{tpu_custom_call.1} parent=5 // pred_fallthru
        _
      %p158 = scmp.le.s32.totalorder 1, %s13
      %p159 = scmp.lt.s32.totalorder %s13, 3
      %p160 = pnand %p158, %p159
      %p161 = pneg %p160
      // Predicated region
      $region25: #{tpu_custom_call.1} parent=5 // pred_check
        _
      $region26: #{tpu_custom_call.1} parent=5 // pred_check_branch
        %163 = sbr.rel (%p160) target = $region28
      $region27: #{tpu_custom_call.1} parent=5 // pred_region
        %s164 = ssub.s32 %s13, 1
        %s165 = sand.u32 %s40, 1
        %s166 = scalar_lea.sflag [#allocation5], %s165
        %s167 = sand.u32 %s40, 1
        %s168 = smul.addr %s167, 128
        %s169 = scalar_lea.vmem [#allocation4], %s168
        // Predicated region
        $region29: #{tpu_custom_call.1} parent=27 // pred_check
          %p170 = pneg %p53
        $region30: #{tpu_custom_call.1} parent=27 // pred_check_branch
          %172 = sbr.rel (%p170) target = $region32
        $region31: #{tpu_custom_call.1} parent=27 // pred_region
          %174 = dma.done %s166, 2048
        $region32: #{tpu_custom_call.1} parent=27 // pred_fallthru
          _
        // Predicated region
        $region33: #{tpu_custom_call.1} parent=27 // pred_check
          %p175 = pneg %p74
        $region34: #{tpu_custom_call.1} parent=27 // pred_check_branch
          %177 = sbr.rel (%p175) target = $region36
        $region35: #{tpu_custom_call.1} parent=27 // pred_region
          %179 = dma.done [#allocation8], 8192
        $region36: #{tpu_custom_call.1} parent=27 // pred_fallthru
          _
        %s180 = sand.u32 %s40, 1
        %s181 = scalar_lea.sflag [#allocation5], %s180
        %s182 = sand.u32 %s40, 1
        %s183 = smul.addr %s182, 128
        %s184 = scalar_lea.vmem [#allocation4], %s183
        %p185 = pneg %p53
        %p186 = pneg %p50
        %p187 = pneg %p74
        %p188 = pneg %p71
        %p189 = pneg %p100
        %p190 = pneg %p97
        %s191 = smul.u32 4, %s23
        %p192 = scmp.eq.s32.totalorder %s23, 0
        // Predicated region
        $region37: #{tpu_custom_call.1} parent=27 // pred_check
          %p193 = pneg %p192
        $region38: #{tpu_custom_call.1} parent=27 // pred_check_branch
          %195 = sbr.rel (%p193) target = $region40
        $region39: #{tpu_custom_call.1} parent=27 // pred_region
          %196 = vst [vmem:[#allocation2] sm:$0xff] 0.0
          %197 = vst [vmem:[#allocation3] sm:$0xff] 0.0
        $region40: #{tpu_custom_call.1} parent=27 // pred_fallthru
          _
        %v198 = vld [vmem:[#allocation2] sm:$0xff]
        %v199 = vld [vmem:[#allocation3] sm:$0xff]
        %v200 = vld [vmem:[%s169] sm:$0xff]
        %v201 = vld [vmem:[%s169 + $0x8] sm:$0xff]
        %v202 = vld [vmem:[%s169 + $0x10] sm:$0xff]
        %v203 = vld [vmem:[%s169 + $0x18] sm:$0xff]
        %v204 = vld [vmem:[#allocation7] sm:$0xff]
        %v205 = vld [vmem:[#allocation7 + $0x8] sm:$0xff]
        %v206 = vld [vmem:[#allocation7 + $0x10] sm:$0xff]
        %v207 = vld [vmem:[#allocation7 + $0x18] sm:$0xff]
        %v208 = vld [vmem:[#allocation7 + $0x20] sm:$0xff]
        %v209 = vld [vmem:[#allocation7 + $0x28] sm:$0xff]
        %v210 = vld [vmem:[#allocation7 + $0x30] sm:$0xff]
        %v211 = vld [vmem:[#allocation7 + $0x38] sm:$0xff]
        %v212 = vld [vmem:[#allocation7 + $0x40] sm:$0xff]
        %v213 = vld [vmem:[#allocation7 + $0x48] sm:$0xff]
        %v214 = vld [vmem:[#allocation7 + $0x50] sm:$0xff]
        %v215 = vld [vmem:[#allocation7 + $0x58] sm:$0xff]
        %v216 = vld [vmem:[#allocation7 + $0x60] sm:$0xff]
        %v217 = vld [vmem:[#allocation7 + $0x68] sm:$0xff]
        %v218 = vld [vmem:[#allocation7 + $0x70] sm:$0xff]
        %v219 = vld [vmem:[#allocation7 + $0x78] sm:$0xff]
        %v220 = vld [vmem:[#allocation7 + $0x80] sm:$0xff]
        %v221 = vld [vmem:[#allocation7 + $0x88] sm:$0xff]
        %v222 = vld [vmem:[#allocation7 + $0x90] sm:$0xff]
        %v223 = vld [vmem:[#allocation7 + $0x98] sm:$0xff]
        %v224 = vld [vmem:[#allocation7 + $0xa0] sm:$0xff]
        %v225 = vld [vmem:[#allocation7 + $0xa8] sm:$0xff]
        %v226 = vld [vmem:[#allocation7 + $0xb0] sm:$0xff]
        %v227 = vld [vmem:[#allocation7 + $0xb8] sm:$0xff]
        %v228 = vld [vmem:[#allocation7 + $0xc0] sm:$0xff]
        %v229 = vld [vmem:[#allocation7 + $0xc8] sm:$0xff]
        %v230 = vld [vmem:[#allocation7 + $0xd0] sm:$0xff]
        %v231 = vld [vmem:[#allocation7 + $0xd8] sm:$0xff]
        %v232 = vld [vmem:[#allocation7 + $0xe0] sm:$0xff]
        %v233 = vld [vmem:[#allocation7 + $0xe8] sm:$0xff]
        %v234 = vld [vmem:[#allocation7 + $0xf0] sm:$0xff]
        %v235 = vld [vmem:[#allocation7 + $0xf8] sm:$0xff]
        %v236 = vld [vmem:[#allocation7 + $0x100] sm:$0xff]
        %v237 = vld [vmem:[#allocation7 + $0x108] sm:$0xff]
        %v238 = vld [vmem:[#allocation7 + $0x110] sm:$0xff]
        %v239 = vld [vmem:[#allocation7 + $0x118] sm:$0xff]
        %v240 = vld [vmem:[#allocation7 + $0x120] sm:$0xff]
        %v241 = vld [vmem:[#allocation7 + $0x128] sm:$0xff]
        %v242 = vld [vmem:[#allocation7 + $0x130] sm:$0xff]
        %v243 = vld [vmem:[#allocation7 + $0x138] sm:$0xff]
        %v244 = vld [vmem:[#allocation7 + $0x140] sm:$0xff]
        %v245 = vld [vmem:[#allocation7 + $0x148] sm:$0xff]
        %v246 = vld [vmem:[#allocation7 + $0x150] sm:$0xff]
        %v247 = vld [vmem:[#allocation7 + $0x158] sm:$0xff]
        %v248 = vld [vmem:[#allocation7 + $0x160] sm:$0xff]
        %v249 = vld [vmem:[#allocation7 + $0x168] sm:$0xff]
        %v250 = vld [vmem:[#allocation7 + $0x170] sm:$0xff]
        %v251 = vld [vmem:[#allocation7 + $0x178] sm:$0xff]
        %v252 = vld [vmem:[#allocation7 + $0x180] sm:$0xff]
        %v253 = vld [vmem:[#allocation7 + $0x188] sm:$0xff]
        %v254 = vld [vmem:[#allocation7 + $0x190] sm:$0xff]
        %v255 = vld [vmem:[#allocation7 + $0x198] sm:$0xff]
        %v256 = vld [vmem:[#allocation7 + $0x1a0] sm:$0xff]
        %v257 = vld [vmem:[#allocation7 + $0x1a8] sm:$0xff]
        %v258 = vld [vmem:[#allocation7 + $0x1b0] sm:$0xff]
        %v259 = vld [vmem:[#allocation7 + $0x1b8] sm:$0xff]
        %v260 = vld [vmem:[#allocation7 + $0x1c0] sm:$0xff]
        %v261 = vld [vmem:[#allocation7 + $0x1c8] sm:$0xff]
        %v262 = vld [vmem:[#allocation7 + $0x1d0] sm:$0xff]
        %v263 = vld [vmem:[#allocation7 + $0x1d8] sm:$0xff]
        %v264 = vld [vmem:[#allocation7 + $0x1e0] sm:$0xff]
        %v265 = vld [vmem:[#allocation7 + $0x1e8] sm:$0xff]
        %v266 = vld [vmem:[#allocation7 + $0x1f0] sm:$0xff]
        %v267 = vld [vmem:[#allocation7 + $0x1f8] sm:$0xff]
        %268 = vmatpush.msra.mxu0 %v264
        %269 = vmatpush.msra.mxu0 %v260
        %270 = vmatpush.msra.mxu0 %v256
        %271 = vmatpush.msra.mxu0 %v252
        %272 = vmatpush.msra.mxu0 %v248
        %273 = vmatpush.msra.mxu0 %v244
        %274 = vmatpush.msra.mxu0 %v240
        %275 = vmatpush.msra.mxu0 %v236
        %276 = vmatpush.msra.mxu0 %v232
        %277 = vmatpush.msra.mxu0 %v228
        %278 = vmatpush.msra.mxu0 %v224
        %279 = vmatpush.msra.mxu0 %v220
        %280 = vmatpush.msra.mxu0 %v216
        %281 = vmatpush.msra.mxu0 %v212
        %282 = vmatpush.msra.mxu0 %v208
        %283 = vmatpush.msra.mxu0 %v204
        %284 = vmatmul.f32.gmra.mxu0 %v198
        %v285 = vpop.f32.mrf.mxu0
        %v286 = vadd.f32 0.0, %v285
        %287 = vdwg.mxu0
        %288 = vmatpush.msra.mxu0 %v265
        %289 = vmatpush.msra.mxu0 %v261
        %290 = vmatpush.msra.mxu0 %v257
        %291 = vmatpush.msra.mxu0 %v253
        %292 = vmatpush.msra.mxu0 %v249
        %293 = vmatpush.msra.mxu0 %v245
        %294 = vmatpush.msra.mxu0 %v241
        %295 = vmatpush.msra.mxu0 %v237
        %296 = vmatpush.msra.mxu0 %v233
        %297 = vmatpush.msra.mxu0 %v229
        %298 = vmatpush.msra.mxu0 %v225
        %299 = vmatpush.msra.mxu0 %v221
        %300 = vmatpush.msra.mxu0 %v217
        %301 = vmatpush.msra.mxu0 %v213
        %302 = vmatpush.msra.mxu0 %v209
        %303 = vmatpush.msra.mxu0 %v205
        %304 = vmatmul.f32.gmra.mxu0 %v198
        %v305 = vpop.f32.mrf.mxu0
        %v306 = vadd.f32 0.0, %v305
        %307 = vdwg.mxu0
        %308 = vmatpush.msra.mxu0 %v266
        %309 = vmatpush.msra.mxu0 %v262
        %310 = vmatpush.msra.mxu0 %v258
        %311 = vmatpush.msra.mxu0 %v254
        %312 = vmatpush.msra.mxu0 %v250
        %313 = vmatpush.msra.mxu0 %v246
        %314 = vmatpush.msra.mxu0 %v242
        %315 = vmatpush.msra.mxu0 %v238
        %316 = vmatpush.msra.mxu0 %v234
        %317 = vmatpush.msra.mxu0 %v230
        %318 = vmatpush.msra.mxu0 %v226
        %319 = vmatpush.msra.mxu0 %v222
        %320 = vmatpush.msra.mxu0 %v218
        %321 = vmatpush.msra.mxu0 %v214
        %322 = vmatpush.msra.mxu0 %v210
        %323 = vmatpush.msra.mxu0 %v206
        %324 = vmatmul.f32.gmra.mxu0 %v198
        %v325 = vpop.f32.mrf.mxu0
        %v326 = vadd.f32 0.0, %v325
        %327 = vdwg.mxu0
        %328 = vmatpush.msra.mxu0 %v267
        %329 = vmatpush.msra.mxu0 %v263
        %330 = vmatpush.msra.mxu0 %v259
        %331 = vmatpush.msra.mxu0 %v255
        %332 = vmatpush.msra.mxu0 %v251
        %333 = vmatpush.msra.mxu0 %v247
        %334 = vmatpush.msra.mxu0 %v243
        %335 = vmatpush.msra.mxu0 %v239
        %336 = vmatpush.msra.mxu0 %v235
        %337 = vmatpush.msra.mxu0 %v231
        %338 = vmatpush.msra.mxu0 %v227
        %339 = vmatpush.msra.mxu0 %v223
        %340 = vmatpush.msra.mxu0 %v219
        %341 = vmatpush.msra.mxu0 %v215
        %342 = vmatpush.msra.mxu0 %v211
        %343 = vmatpush.msra.mxu0 %v207
        %344 = vmatmul.f32.gmra.mxu0 %v198
        %v345 = vpop.f32.mrf.mxu0
        %v346 = vadd.f32 0.0, %v345
        %347 = vdwg.mxu0
        %v348 = vadd.f32 %v200, %v286
        %v349 = vadd.f32 %v201, %v306
        %v350 = vadd.f32 %v202, %v326
        %v351 = vadd.f32 %v203, %v346
        %v352 = vmul.f32 %v348, 0.5
        %v353 = vtanh.pop %v352
        %v354 = vmul.f32 %v353, 0.5
        %v355 = vadd.f32 %v354, 0.5
        %v356 = vmul.f32 %v349, 0.5
        %v357 = vtanh.pop %v356
        %v358 = vmul.f32 %v357, 0.5
        %v359 = vadd.f32 %v358, 0.5
        %v360 = vtanh.pop %v350
        %v361 = vmul.f32 %v351, 0.5
        %v362 = vtanh.pop %v361
        %v363 = vmul.f32 %v362, 0.5
        %v364 = vadd.f32 %v363, 0.5
        %v365 = vmul.f32 %v359, %v199
        %v366 = vmul.f32 %v355, %v360
        %v367 = vadd.f32 %v365, %v366
        %v368 = vtanh.pop %v367
        %v369 = vmul.f32 %v364, %v368
        %s370 = scalar_lea.vmem %s169, 32 [#allocation4]
        %v371 = vld [vmem:[%s370] sm:$0xff]
        %v372 = vld [vmem:[%s370 + $0x8] sm:$0xff]
        %v373 = vld [vmem:[%s370 + $0x10] sm:$0xff]
        %v374 = vld [vmem:[%s370 + $0x18] sm:$0xff]
        %375 = vmatpush.msra.mxu0 %v264
        %376 = vmatpush.msra.mxu0 %v260
        %377 = vmatpush.msra.mxu0 %v256
        %378 = vmatpush.msra.mxu0 %v252
        %379 = vmatpush.msra.mxu0 %v248
        %380 = vmatpush.msra.mxu0 %v244
        %381 = vmatpush.msra.mxu0 %v240
        %382 = vmatpush.msra.mxu0 %v236
        %383 = vmatpush.msra.mxu0 %v232
        %384 = vmatpush.msra.mxu0 %v228
        %385 = vmatpush.msra.mxu0 %v224
        %386 = vmatpush.msra.mxu0 %v220
        %387 = vmatpush.msra.mxu0 %v216
        %388 = vmatpush.msra.mxu0 %v212
        %389 = vmatpush.msra.mxu0 %v208
        %390 = vmatpush.msra.mxu0 %v204
        %391 = vmatmul.f32.gmra.mxu0 %v369
        %v392 = vpop.f32.mrf.mxu0
        %v393 = vadd.f32 0.0, %v392
        %394 = vdwg.mxu0
        %395 = vmatpush.msra.mxu0 %v265
        %396 = vmatpush.msra.mxu0 %v261
        %397 = vmatpush.msra.mxu0 %v257
        %398 = vmatpush.msra.mxu0 %v253
        %399 = vmatpush.msra.mxu0 %v249
        %400 = vmatpush.msra.mxu0 %v245
        %401 = vmatpush.msra.mxu0 %v241
        %402 = vmatpush.msra.mxu0 %v237
        %403 = vmatpush.msra.mxu0 %v233
        %404 = vmatpush.msra.mxu0 %v229
        %405 = vmatpush.msra.mxu0 %v225
        %406 = vmatpush.msra.mxu0 %v221
        %407 = vmatpush.msra.mxu0 %v217
        %408 = vmatpush.msra.mxu0 %v213
        %409 = vmatpush.msra.mxu0 %v209
        %410 = vmatpush.msra.mxu0 %v205
        %411 = vmatmul.f32.gmra.mxu0 %v369
        %v412 = vpop.f32.mrf.mxu0
        %v413 = vadd.f32 0.0, %v412
        %414 = vdwg.mxu0
        %415 = vmatpush.msra.mxu0 %v266
        %416 = vmatpush.msra.mxu0 %v262
        %417 = vmatpush.msra.mxu0 %v258
        %418 = vmatpush.msra.mxu0 %v254
        %419 = vmatpush.msra.mxu0 %v250
        %420 = vmatpush.msra.mxu0 %v246
        %421 = vmatpush.msra.mxu0 %v242
        %422 = vmatpush.msra.mxu0 %v238
        %423 = vmatpush.msra.mxu0 %v234
        %424 = vmatpush.msra.mxu0 %v230
        %425 = vmatpush.msra.mxu0 %v226
        %426 = vmatpush.msra.mxu0 %v222
        %427 = vmatpush.msra.mxu0 %v218
        %428 = vmatpush.msra.mxu0 %v214
        %429 = vmatpush.msra.mxu0 %v210
        %430 = vmatpush.msra.mxu0 %v206
        %431 = vmatmul.f32.gmra.mxu0 %v369
        %v432 = vpop.f32.mrf.mxu0
        %v433 = vadd.f32 0.0, %v432
        %434 = vdwg.mxu0
        %435 = vmatpush.msra.mxu0 %v267
        %436 = vmatpush.msra.mxu0 %v263
        %437 = vmatpush.msra.mxu0 %v259
        %438 = vmatpush.msra.mxu0 %v255
        %439 = vmatpush.msra.mxu0 %v251
        %440 = vmatpush.msra.mxu0 %v247
        %441 = vmatpush.msra.mxu0 %v243
        %442 = vmatpush.msra.mxu0 %v239
        %443 = vmatpush.msra.mxu0 %v235
        %444 = vmatpush.msra.mxu0 %v231
        %445 = vmatpush.msra.mxu0 %v227
        %446 = vmatpush.msra.mxu0 %v223
        %447 = vmatpush.msra.mxu0 %v219
        %448 = vmatpush.msra.mxu0 %v215
        %449 = vmatpush.msra.mxu0 %v211
        %450 = vmatpush.msra.mxu0 %v207
        %451 = vmatmul.f32.gmra.mxu0 %v369
        %v452 = vpop.f32.mrf.mxu0
        %v453 = vadd.f32 0.0, %v452
        %454 = vdwg.mxu0
        %v455 = vadd.f32 %v371, %v393
        %v456 = vadd.f32 %v372, %v413
        %v457 = vadd.f32 %v373, %v433
        %v458 = vadd.f32 %v374, %v453
        %v459 = vmul.f32 %v455, 0.5
        %v460 = vtanh.pop %v459
        %v461 = vmul.f32 %v460, 0.5
        %v462 = vadd.f32 %v461, 0.5
        %v463 = vmul.f32 %v456, 0.5
        %v464 = vtanh.pop %v463
        %v465 = vmul.f32 %v464, 0.5
        %v466 = vadd.f32 %v465, 0.5
        %v467 = vtanh.pop %v457
        %v468 = vmul.f32 %v458, 0.5
        %v469 = vtanh.pop %v468
        %v470 = vmul.f32 %v469, 0.5
        %v471 = vadd.f32 %v470, 0.5
        %v472 = vmul.f32 %v466, %v367
        %v473 = vmul.f32 %v462, %v467
        %v474 = vadd.f32 %v472, %v473
        %v475 = vtanh.pop %v474
        %v476 = vmul.f32 %v471, %v475
        %s477 = scalar_lea.vmem %s169, 64 [#allocation4]
        %v478 = vld [vmem:[%s477] sm:$0xff]
        %v479 = vld [vmem:[%s477 + $0x8] sm:$0xff]
        %v480 = vld [vmem:[%s477 + $0x10] sm:$0xff]
        %v481 = vld [vmem:[%s477 + $0x18] sm:$0xff]
        %482 = vmatpush.msra.mxu0 %v264
        %483 = vmatpush.msra.mxu0 %v260
        %484 = vmatpush.msra.mxu0 %v256
        %485 = vmatpush.msra.mxu0 %v252
        %486 = vmatpush.msra.mxu0 %v248
        %487 = vmatpush.msra.mxu0 %v244
        %488 = vmatpush.msra.mxu0 %v240
        %489 = vmatpush.msra.mxu0 %v236
        %490 = vmatpush.msra.mxu0 %v232
        %491 = vmatpush.msra.mxu0 %v228
        %492 = vmatpush.msra.mxu0 %v224
        %493 = vmatpush.msra.mxu0 %v220
        %494 = vmatpush.msra.mxu0 %v216
        %495 = vmatpush.msra.mxu0 %v212
        %496 = vmatpush.msra.mxu0 %v208
        %497 = vmatpush.msra.mxu0 %v204
        %498 = vmatmul.f32.gmra.mxu0 %v476
        %v499 = vpop.f32.mrf.mxu0
        %v500 = vadd.f32 0.0, %v499
        %501 = vdwg.mxu0
        %502 = vmatpush.msra.mxu0 %v265
        %503 = vmatpush.msra.mxu0 %v261
        %504 = vmatpush.msra.mxu0 %v257
        %505 = vmatpush.msra.mxu0 %v253
        %506 = vmatpush.msra.mxu0 %v249
        %507 = vmatpush.msra.mxu0 %v245
        %508 = vmatpush.msra.mxu0 %v241
        %509 = vmatpush.msra.mxu0 %v237
        %510 = vmatpush.msra.mxu0 %v233
        %511 = vmatpush.msra.mxu0 %v229
        %512 = vmatpush.msra.mxu0 %v225
        %513 = vmatpush.msra.mxu0 %v221
        %514 = vmatpush.msra.mxu0 %v217
        %515 = vmatpush.msra.mxu0 %v213
        %516 = vmatpush.msra.mxu0 %v209
        %517 = vmatpush.msra.mxu0 %v205
        %518 = vmatmul.f32.gmra.mxu0 %v476
        %v519 = vpop.f32.mrf.mxu0
        %v520 = vadd.f32 0.0, %v519
        %521 = vdwg.mxu0
        %522 = vmatpush.msra.mxu0 %v266
        %523 = vmatpush.msra.mxu0 %v262
        %524 = vmatpush.msra.mxu0 %v258
        %525 = vmatpush.msra.mxu0 %v254
        %526 = vmatpush.msra.mxu0 %v250
        %527 = vmatpush.msra.mxu0 %v246
        %528 = vmatpush.msra.mxu0 %v242
        %529 = vmatpush.msra.mxu0 %v238
        %530 = vmatpush.msra.mxu0 %v234
        %531 = vmatpush.msra.mxu0 %v230
        %532 = vmatpush.msra.mxu0 %v226
        %533 = vmatpush.msra.mxu0 %v222
        %534 = vmatpush.msra.mxu0 %v218
        %535 = vmatpush.msra.mxu0 %v214
        %536 = vmatpush.msra.mxu0 %v210
        %537 = vmatpush.msra.mxu0 %v206
        %538 = vmatmul.f32.gmra.mxu0 %v476
        %v539 = vpop.f32.mrf.mxu0
        %v540 = vadd.f32 0.0, %v539
        %541 = vdwg.mxu0
        %542 = vmatpush.msra.mxu0 %v267
        %543 = vmatpush.msra.mxu0 %v263
        %544 = vmatpush.msra.mxu0 %v259
        %545 = vmatpush.msra.mxu0 %v255
        %546 = vmatpush.msra.mxu0 %v251
        %547 = vmatpush.msra.mxu0 %v247
        %548 = vmatpush.msra.mxu0 %v243
        %549 = vmatpush.msra.mxu0 %v239
        %550 = vmatpush.msra.mxu0 %v235
        %551 = vmatpush.msra.mxu0 %v231
        %552 = vmatpush.msra.mxu0 %v227
        %553 = vmatpush.msra.mxu0 %v223
        %554 = vmatpush.msra.mxu0 %v219
        %555 = vmatpush.msra.mxu0 %v215
        %556 = vmatpush.msra.mxu0 %v211
        %557 = vmatpush.msra.mxu0 %v207
        %558 = vmatmul.f32.gmra.mxu0 %v476
        %v559 = vpop.f32.mrf.mxu0
        %v560 = vadd.f32 0.0, %v559
        %561 = vdwg.mxu0
        %v562 = vadd.f32 %v478, %v500
        %v563 = vadd.f32 %v479, %v520
        %v564 = vadd.f32 %v480, %v540
        %v565 = vadd.f32 %v481, %v560
        %v566 = vmul.f32 %v562, 0.5
        %v567 = vtanh.pop %v566
        %v568 = vmul.f32 %v567, 0.5
        %v569 = vadd.f32 %v568, 0.5
        %v570 = vmul.f32 %v563, 0.5
        %v571 = vtanh.pop %v570
        %v572 = vmul.f32 %v571, 0.5
        %v573 = vadd.f32 %v572, 0.5
        %v574 = vtanh.pop %v564
        %v575 = vmul.f32 %v565, 0.5
        %v576 = vtanh.pop %v575
        %v577 = vmul.f32 %v576, 0.5
        %v578 = vadd.f32 %v577, 0.5
        %v579 = vmul.f32 %v573, %v474
        %v580 = vmul.f32 %v569, %v574
        %v581 = vadd.f32 %v579, %v580
        %v582 = vtanh.pop %v581
        %v583 = vmul.f32 %v578, %v582
        %s584 = scalar_lea.vmem %s169, 96 [#allocation4]
        %v585 = vld [vmem:[%s584] sm:$0xff]
        %v586 = vld [vmem:[%s584 + $0x8] sm:$0xff]
        %v587 = vld [vmem:[%s584 + $0x10] sm:$0xff]
        %v588 = vld [vmem:[%s584 + $0x18] sm:$0xff]
        %589 = vmatpush.msra.mxu0 %v264
        %590 = vmatpush.msra.mxu0 %v260
        %591 = vmatpush.msra.mxu0 %v256
        %592 = vmatpush.msra.mxu0 %v252
        %593 = vmatpush.msra.mxu0 %v248
        %594 = vmatpush.msra.mxu0 %v244
        %595 = vmatpush.msra.mxu0 %v240
        %596 = vmatpush.msra.mxu0 %v236
        %597 = vmatpush.msra.mxu0 %v232
        %598 = vmatpush.msra.mxu0 %v228
        %599 = vmatpush.msra.mxu0 %v224
        %600 = vmatpush.msra.mxu0 %v220
        %601 = vmatpush.msra.mxu0 %v216
        %602 = vmatpush.msra.mxu0 %v212
        %603 = vmatpush.msra.mxu0 %v208
        %604 = vmatpush.msra.mxu0 %v204
        %605 = vmatmul.f32.gmra.mxu0 %v583
        %v606 = vpop.f32.mrf.mxu0
        %v607 = vadd.f32 0.0, %v606
        %608 = vdwg.mxu0
        %609 = vmatpush.msra.mxu0 %v265
        %610 = vmatpush.msra.mxu0 %v261
        %611 = vmatpush.msra.mxu0 %v257
        %612 = vmatpush.msra.mxu0 %v253
        %613 = vmatpush.msra.mxu0 %v249
        %614 = vmatpush.msra.mxu0 %v245
        %615 = vmatpush.msra.mxu0 %v241
        %616 = vmatpush.msra.mxu0 %v237
        %617 = vmatpush.msra.mxu0 %v233
        %618 = vmatpush.msra.mxu0 %v229
        %619 = vmatpush.msra.mxu0 %v225
        %620 = vmatpush.msra.mxu0 %v221
        %621 = vmatpush.msra.mxu0 %v217
        %622 = vmatpush.msra.mxu0 %v213
        %623 = vmatpush.msra.mxu0 %v209
        %624 = vmatpush.msra.mxu0 %v205
        %625 = vmatmul.f32.gmra.mxu0 %v583
        %v626 = vpop.f32.mrf.mxu0
        %v627 = vadd.f32 0.0, %v626
        %628 = vdwg.mxu0
        %629 = vmatpush.msra.mxu0 %v266
        %630 = vmatpush.msra.mxu0 %v262
        %631 = vmatpush.msra.mxu0 %v258
        %632 = vmatpush.msra.mxu0 %v254
        %633 = vmatpush.msra.mxu0 %v250
        %634 = vmatpush.msra.mxu0 %v246
        %635 = vmatpush.msra.mxu0 %v242
        %636 = vmatpush.msra.mxu0 %v238
        %637 = vmatpush.msra.mxu0 %v234
        %638 = vmatpush.msra.mxu0 %v230
        %639 = vmatpush.msra.mxu0 %v226
        %640 = vmatpush.msra.mxu0 %v222
        %641 = vmatpush.msra.mxu0 %v218
        %642 = vmatpush.msra.mxu0 %v214
        %643 = vmatpush.msra.mxu0 %v210
        %644 = vmatpush.msra.mxu0 %v206
        %645 = vmatmul.f32.gmra.mxu0 %v583
        %v646 = vpop.f32.mrf.mxu0
        %v647 = vadd.f32 0.0, %v646
        %648 = vdwg.mxu0
        %649 = vmatpush.msra.mxu0 %v267
        %650 = vmatpush.msra.mxu0 %v263
        %651 = vmatpush.msra.mxu0 %v259
        %652 = vmatpush.msra.mxu0 %v255
        %653 = vmatpush.msra.mxu0 %v251
        %654 = vmatpush.msra.mxu0 %v247
        %655 = vmatpush.msra.mxu0 %v243
        %656 = vmatpush.msra.mxu0 %v239
        %657 = vmatpush.msra.mxu0 %v235
        %658 = vmatpush.msra.mxu0 %v231
        %659 = vmatpush.msra.mxu0 %v227
        %660 = vmatpush.msra.mxu0 %v223
        %661 = vmatpush.msra.mxu0 %v219
        %662 = vmatpush.msra.mxu0 %v215
        %663 = vmatpush.msra.mxu0 %v211
        %664 = vmatpush.msra.mxu0 %v207
        %665 = vmatmul.f32.gmra.mxu0 %v583
        %v666 = vpop.f32.mrf.mxu0
        %v667 = vadd.f32 0.0, %v666
        %668 = vdwg.mxu0
        %v669 = vadd.f32 %v585, %v607
        %v670 = vadd.f32 %v586, %v627
        %v671 = vadd.f32 %v587, %v647
        %v672 = vadd.f32 %v588, %v667
        %v673 = vmul.f32 %v669, 0.5
        %v674 = vtanh.pop %v673
        %v675 = vmul.f32 %v674, 0.5
        %v676 = vadd.f32 %v675, 0.5
        %v677 = vmul.f32 %v670, 0.5
        %v678 = vtanh.pop %v677
        %v679 = vmul.f32 %v678, 0.5
        %v680 = vadd.f32 %v679, 0.5
        %v681 = vtanh.pop %v671
        %v682 = vmul.f32 %v672, 0.5
        %v683 = vtanh.pop %v682
        %v684 = vmul.f32 %v683, 0.5
        %v685 = vadd.f32 %v684, 0.5
        %v686 = vmul.f32 %v680, %v581
        %v687 = vmul.f32 %v676, %v681
        %v688 = vadd.f32 %v686, %v687
        %v689 = vtanh.pop %v688
        %v690 = vmul.f32 %v685, %v689
        %691 = vst [vmem:[#allocation2] sm:$0xff] %v690
        %692 = vst [vmem:[#allocation3] sm:$0xff] %v688
        %693 = vst [vmem:[#allocation9] sm:$0xff] %v690
        // Predicated region
        $region41: #{tpu_custom_call.1} parent=27 // pred_check
          %p694 = pneg %p97
        $region42: #{tpu_custom_call.1} parent=27 // pred_check_branch
          %696 = sbr.rel (%p694) target = $region44
        $region43: #{tpu_custom_call.1} parent=27 // pred_region
          %698 = vsyncadd [#allocation6], 0
          %s699 = smul.addr %s22, 8
          %s700 = scalar_lea.hbm %s2, %s699
          %s702 = sshll.u32 [#allocation9], 4
          %s703 = int_to_ptr.vmem [resolvable:$true] %s702
          %s704 = sshll.u32 %s700, 4
          %s705 = int_to_ptr.hbm [resolvable:$true] %s704
          %707 = dma.vmem_to_hbm [thread:$0]  %s703, 128, %s705, [#allocation6]
        $region44: #{tpu_custom_call.1} parent=27 // pred_fallthru
          _
        // Predicated region
        $region45: #{tpu_custom_call.1} parent=27 // pred_check
          %p708 = pneg %p97
        $region46: #{tpu_custom_call.1} parent=27 // pred_check_branch
          %710 = sbr.rel (%p708) target = $region48
        $region47: #{tpu_custom_call.1} parent=27 // pred_region
          %712 = dma.done [#allocation6], 128
        $region48: #{tpu_custom_call.1} parent=27 // pred_fallthru
          _
      $region28: #{tpu_custom_call.1} parent=5 // pred_fallthru
        _
      %p713 = scmp.le.s32.totalorder 2, %s13
      // Predicated region
      $region49: #{tpu_custom_call.1} parent=5 // pred_check
        %p714 = pneg %p713
      $region50: #{tpu_custom_call.1} parent=5 // pred_check_branch
        %716 = sbr.rel (%p714) target = $region52
      $region51: #{tpu_custom_call.1} parent=5 // pred_region
        %s717 = ssub.s32 %s13, 2
      $region52: #{tpu_custom_call.1} parent=5 // pred_fallthru
        _
    $region6: #{tpu_custom_call.1} parent=1 // loop_footer
      %s17 = sadd.s32 1, %s13
    $region7: #{tpu_custom_call.1} parent=1 // loop_footer_branch
      %12 = sbr.rel target = $region3
    $region8: #{tpu_custom_call.1} parent=1 // loop_exit
      _
    %718 = vsyncpa [#allocation5], 1
    %s719 = scalar_lea.sflag [#allocation5], 1
    %720 = vsyncpa %s719, 1
    %721 = vsyncpa [#allocation8], 1
    %722 = vsyncpa [#allocation6], 1
    %s723 = scalar_lea.sflag [#allocation6], 1
    %724 = vsyncpa %s723, 1

</llo_original>
